<compile_context>
chip_gen: v7x
topology: tpu7x:2x2x1
jax: 0.10.0
libtpu: 0.0.40
codegen_flags: <defaults>
</compile_context>

<pallas_src>
import functools

import jax
import jax.numpy as jnp
from jax import lax
from jax.experimental import pallas as pl
from jax.experimental.pallas import tpu as pltpu

LANE = 128


def _round_up(x, m):
    return ((x + m - 1) // m) * m


def _choose_tile(B, block_b):
    """Pick the batch tile TB and padded batch B_pad.

    TB is always a multiple of 8 and <= round_up(block_b, 8).  For large B the
    tile is capped so the grid has >= ~4 steps (v7x megacore sharding).  Prefers
    a TB dividing round_up(B, 8) so no extra wrapper padding is needed; falls
    back to padding B up to a multiple of TB when no decent divisor exists.
    """
    B8 = _round_up(max(B, 1), 8)
    cap = max(8, min(_round_up(block_b, 8), _round_up(-(-B8 // 4), 8)))
    n8 = B8 // 8
    divisor_tile = 8
    for d in range(cap // 8, 0, -1):
        if n8 % d == 0:
            divisor_tile = d * 8
            break
    if divisor_tile * 4 >= cap:          # big enough: skip the extra pad pass
        return divisor_tile, B8
    return cap, _round_up(B8, cap)


def actionnet_kernel(x_ref, w1_ref, w23_ref, b_ref, o_ref, *, n_input, cols, n_control):
    x = x_ref[...].astype(jnp.float32)                    # (TB, n_input)

    # --- layer 1: K = n_input (tiny) -> broadcast FMAs (VPU + XLU lane-broadcast).
    # Padded lanes (>= n_hidden) stay exactly 0 because their weights/bias are 0.
    acc = x[:, 0:1] * w1_ref[0:1, :] + b_ref[0:1, :]
    for k in range(1, n_input):                           # static unroll (n_input == 4)
        acc = acc + x[:, k:k + 1] * w1_ref[k:k + 1, :]
    h = jnp.tanh(acc)                                     # (TB, cols), f32

    # --- layer 2: 64x64 matmul zero-padded to cols x cols; bf16 operands on the
    #     MXU with f32 accumulate; bias-add and tanh stay f32.
    h = jnp.tanh(
        jnp.dot(h.astype(jnp.bfloat16), w23_ref[0:cols, :],
                preferred_element_type=jnp.float32)
        + b_ref[1:2, :])

    # --- layer 3: bf16 MXU matmul; store only the first n_control lanes so the
    #     HBM writeback is a narrow (TB, n_control) block, not a padded 128-lane slab.
    out = (jnp.dot(h.astype(jnp.bfloat16), w23_ref[cols:2 * cols, :],
                   preferred_element_type=jnp.float32)
           + b_ref[2:3, :])
    o_ref[...] = out[:, :n_control].astype(o_ref.dtype)


def pack_params(params):
    """Pack w1,b1,w2,b2,w3,b3 into f32 layer-1 slab, bf16 layer-2/3 slab, f32 biases."""
    w1, w2, w3 = params["w1"], params["w2"], params["w3"]
    b1, b2, b3 = params["b1"], params["b2"], params["b3"]
    n_input, n_hidden = w1.shape
    n_control = w3.shape[1]
    cols = max(_round_up(n_hidden, LANE), _round_up(n_control, LANE))

    # Layer 1 stays f32 (inputs are unbounded; this layer never touches the MXU).
    w1_slab = jnp.zeros((n_input, cols), jnp.float32).at[:, :n_hidden].set(w1)

    # Layers 2/3: bf16 MXU operands.  Padded rows/cols are exact zeros so the
    # padded lanes carry zeros end to end through both tanh passes.
    w23_slab = jnp.zeros((2 * cols, cols), jnp.float32)
    w23_slab = w23_slab.at[:n_hidden, :n_hidden].set(w2)
    w23_slab = w23_slab.at[cols:cols + n_hidden, :n_control].set(w3)
    w23_slab = w23_slab.astype(jnp.bfloat16)

    b_slab = jnp.zeros((3, cols), jnp.float32)
    b_slab = b_slab.at[0, :n_hidden].set(b1[0])
    b_slab = b_slab.at[1, :n_hidden].set(b2[0])
    b_slab = b_slab.at[2, :n_control].set(b3[0])
    return w1_slab, w23_slab, b_slab, n_control


@functools.partial(jax.jit, static_argnames=("n_control", "block_b"))
def actionnet_forward(x, w1_slab, w23_slab, b_slab, *, n_control, block_b=2048):
    """x: (B, n_input) f32; slabs from pack_params. Returns (B, n_control) f32."""
    B, n_input = x.shape
    cols = w1_slab.shape[1]

    TB, B_pad = _choose_tile(B, block_b)
    if B_pad != B:
        x = jnp.pad(x, ((0, B_pad - B), (0, 0)))

    kernel = functools.partial(
        actionnet_kernel, n_input=n_input, cols=cols, n_control=n_control)

    out = pl.pallas_call(
        kernel,
        out_shape=jax.ShapeDtypeStruct((B_pad, n_control), jnp.float32),
        grid=(B_pad // TB,),
        in_specs=[
            pl.BlockSpec((TB, n_input), lambda i: (i, 0)),    # batch-tiled activations
            pl.BlockSpec(w1_slab.shape, lambda i: (0, 0)),    # VMEM-resident (f32)
            pl.BlockSpec(w23_slab.shape, lambda i: (0, 0)),   # VMEM-resident (bf16)
            pl.BlockSpec(b_slab.shape, lambda i: (0, 0)),     # VMEM-resident (f32)
        ],
        out_specs=pl.BlockSpec((TB, n_control), lambda i: (i, 0)),
        compiler_params=pltpu.CompilerParams(
            dimension_semantics=("parallel",),
            vmem_limit_bytes=32 * 1024 * 1024),
    )(x, w1_slab, w23_slab, b_slab)

    return out if B_pad == B else out[:B]


def init_params(key, n_input=4, n_hidden=64, n_control=2):
    """Deterministic init mimicking nn.Linear's uniform(-1/sqrt(fan_in), +1/sqrt(fan_in))."""
    ks = jax.random.split(key, 6)

    def linear(kw, kb, fan_in, fan_out):
        bound = 1.0 / jnp.sqrt(fan_in)
        w = jax.random.uniform(kw, (fan_in, fan_out), jnp.float32, -bound, bound)
        b = jax.random.uniform(kb, (1, fan_out), jnp.float32, -bound, bound)
        return w, b

    w1, b1 = linear(ks[0], ks[1], n_input, n_hidden)
    w2, b2 = linear(ks[2], ks[3], n_hidden, n_hidden)
    w3, b3 = linear(ks[4], ks[5], n_hidden, n_control)
    return {"w1": w1, "b1": b1, "w2": w2, "b2": b2, "w3": w3, "b3": b3}


def actionnet_reference(x, p):
    hi = lax.Precision.HIGHEST
    h1 = jnp.tanh(jnp.dot(x, p["w1"], precision=hi) + p["b1"])
    h2 = jnp.tanh(jnp.dot(h1, p["w2"], precision=hi) + p["b2"])
    return jnp.dot(h2, p["w3"], precision=hi) + p["b3"]


if __name__ == "__main__":
    key = jax.random.PRNGKey(0)
    k_param, k_x1, k_x2 = jax.random.split(key, 3)

    n_input, n_hidden, n_control = 4, 64, 2
    params = init_params(k_param, n_input, n_hidden, n_control)
    w1_slab, w23_slab, b_slab, n_ctrl = pack_params(params)

    # Tolerance reflects bf16 MXU operands on layers 2/3 (f32 accumulate).
    ATOL, RTOL = 2e-2, 2e-2

    # Small, single-tile batch.
    x_small = jax.random.normal(k_x1, (8, n_input), jnp.float32)
    out_small = jax.block_until_ready(
        actionnet_forward(x_small, w1_slab, w23_slab, b_slab, n_control=n_ctrl))
    ref_small = actionnet_reference(x_small, params)
    assert out_small.shape == (8, n_control), out_small.shape
    assert jnp.allclose(out_small, ref_small, atol=ATOL, rtol=RTOL), "mismatch (small batch)"

    # Larger batch that is not a tile multiple: exercises the tile chooser,
    # the multi-step parallel grid and the tail-padding path.
    x_big = jax.random.normal(k_x2, (300, n_input), jnp.float32)
    out_big = jax.block_until_ready(
        actionnet_forward(x_big, w1_slab, w23_slab, b_slab, n_control=n_ctrl))
    ref_big = actionnet_reference(x_big, params)
    assert out_big.shape == (300, n_control), out_big.shape
    assert jnp.allclose(out_big, ref_big, atol=ATOL, rtol=RTOL), "mismatch (big batch)"

    print("KERNEL_OK")
</pallas_src>

<mosaic_0001>
module attributes {stable_mosaic.version = 11 : i64} {
  func.func @actionnet_kernel(%arg0: i32, %arg1: memref<8x4xf32, #tpu.memory_space<vmem>>, %arg2: memref<4x128xf32, #tpu.memory_space<vmem>>, %arg3: memref<256x128xbf16, #tpu.memory_space<vmem>>, %arg4: memref<3x128xf32, #tpu.memory_space<vmem>>, %arg5: memref<8x2xf32, #tpu.memory_space<vmem>>) attributes {dimension_semantics = [#tpu.dimension_semantics<parallel>], iteration_bounds = array<i64: 1>, scalar_prefetch = 0 : i64, scratch_operands = 0 : i64, tpu.core_type = #tpu.core_type<tc>, window_params = [{transform_indices = @transform_0, window_bounds = array<i64: 8, 4>}, {pipeline_mode = #tpu.pipeline_mode<synchronous>, transform_indices = @transform_1, window_bounds = array<i64: 4, 128>}, {pipeline_mode = #tpu.pipeline_mode<synchronous>, transform_indices = @transform_2, window_bounds = array<i64: 256, 128>}, {pipeline_mode = #tpu.pipeline_mode<synchronous>, transform_indices = @transform_3, window_bounds = array<i64: 3, 128>}, {transform_indices = @transform_4, window_bounds = array<i64: 8, 2>}]} {
    %c0 = arith.constant 0 : index
    %c0_0 = arith.constant 0 : index
    %0 = vector.load %arg1[%c0, %c0_0] : memref<8x4xf32, #tpu.memory_space<vmem>>, vector<8x4xf32>
    %1 = vector.extract_strided_slice %0 {offsets = [0, 0], sizes = [8, 1], strides = [1, 1]} : vector<8x4xf32> to vector<8x1xf32>
    %c0_1 = arith.constant 0 : index
    %c0_2 = arith.constant 0 : index
    %2 = vector.load %arg2[%c0_1, %c0_2] : memref<4x128xf32, #tpu.memory_space<vmem>>, vector<1x128xf32>
    %3 = vector.broadcast %1 : vector<8x1xf32> to vector<8x128xf32>
    %4 = vector.broadcast %2 : vector<1x128xf32> to vector<8x128xf32>
    %5 = arith.mulf %3, %4 : vector<8x128xf32>
    %c0_3 = arith.constant 0 : index
    %c0_4 = arith.constant 0 : index
    %6 = vector.load %arg4[%c0_3, %c0_4] : memref<3x128xf32, #tpu.memory_space<vmem>>, vector<1x128xf32>
    %7 = vector.broadcast %6 : vector<1x128xf32> to vector<8x128xf32>
    %8 = arith.addf %5, %7 : vector<8x128xf32>
    %9 = vector.extract_strided_slice %0 {offsets = [0, 1], sizes = [8, 1], strides = [1, 1]} : vector<8x4xf32> to vector<8x1xf32>
    %c1 = arith.constant 1 : index
    %c0_5 = arith.constant 0 : index
    %10 = vector.load %arg2[%c1, %c0_5] : memref<4x128xf32, #tpu.memory_space<vmem>>, vector<1x128xf32>
    %11 = vector.broadcast %9 : vector<8x1xf32> to vector<8x128xf32>
    %12 = vector.broadcast %10 : vector<1x128xf32> to vector<8x128xf32>
    %13 = arith.mulf %11, %12 : vector<8x128xf32>
    %14 = arith.addf %8, %13 : vector<8x128xf32>
    %15 = vector.extract_strided_slice %0 {offsets = [0, 2], sizes = [8, 1], strides = [1, 1]} : vector<8x4xf32> to vector<8x1xf32>
    %c2 = arith.constant 2 : index
    %c0_6 = arith.constant 0 : index
    %16 = vector.load %arg2[%c2, %c0_6] : memref<4x128xf32, #tpu.memory_space<vmem>>, vector<1x128xf32>
    %17 = vector.broadcast %15 : vector<8x1xf32> to vector<8x128xf32>
    %18 = vector.broadcast %16 : vector<1x128xf32> to vector<8x128xf32>
    %19 = arith.mulf %17, %18 : vector<8x128xf32>
    %20 = arith.addf %14, %19 : vector<8x128xf32>
    %21 = vector.extract_strided_slice %0 {offsets = [0, 3], sizes = [8, 1], strides = [1, 1]} : vector<8x4xf32> to vector<8x1xf32>
    %c3 = arith.constant 3 : index
    %c0_7 = arith.constant 0 : index
    %22 = vector.load %arg2[%c3, %c0_7] : memref<4x128xf32, #tpu.memory_space<vmem>>, vector<1x128xf32>
    %23 = vector.broadcast %21 : vector<8x1xf32> to vector<8x128xf32>
    %24 = vector.broadcast %22 : vector<1x128xf32> to vector<8x128xf32>
    %25 = arith.mulf %23, %24 : vector<8x128xf32>
    %26 = arith.addf %20, %25 : vector<8x128xf32>
    %27 = math.tanh %26 : vector<8x128xf32>
    %28 = arith.truncf %27 : vector<8x128xf32> to vector<8x128xbf16>
    %c0_8 = arith.constant 0 : index
    %c0_9 = arith.constant 0 : index
    %29 = vector.load %arg3[%c0_8, %c0_9] : memref<256x128xbf16, #tpu.memory_space<vmem>>, vector<128x128xbf16>
    %cst = arith.constant dense<0.000000e+00> : vector<8x128xf32>
    %30 = tpu.matmul %28, %29, %cst {dimension_numbers = #tpu.dot_dimension_numbers<[1], [0], [0], [1], [0, 0, 1, 1], [], []>} : vector<8x128xbf16>, vector<128x128xbf16>, vector<8x128xf32> -> vector<8x128xf32>
    %c1_10 = arith.constant 1 : index
    %c0_11 = arith.constant 0 : index
    %31 = vector.load %arg4[%c1_10, %c0_11] : memref<3x128xf32, #tpu.memory_space<vmem>>, vector<1x128xf32>
    %32 = vector.broadcast %31 : vector<1x128xf32> to vector<8x128xf32>
    %33 = arith.addf %30, %32 : vector<8x128xf32>
    %34 = math.tanh %33 : vector<8x128xf32>
    %35 = arith.truncf %34 : vector<8x128xf32> to vector<8x128xbf16>
    %c128 = arith.constant 128 : index
    %c0_12 = arith.constant 0 : index
    %36 = vector.load %arg3[%c128, %c0_12] : memref<256x128xbf16, #tpu.memory_space<vmem>>, vector<128x128xbf16>
    %cst_13 = arith.constant dense<0.000000e+00> : vector<8x128xf32>
    %37 = tpu.matmul %35, %36, %cst_13 {dimension_numbers = #tpu.dot_dimension_numbers<[1], [0], [0], [1], [0, 0, 1, 1], [], []>} : vector<8x128xbf16>, vector<128x128xbf16>, vector<8x128xf32> -> vector<8x128xf32>
    %c2_14 = arith.constant 2 : index
    %c0_15 = arith.constant 0 : index
    %38 = vector.load %arg4[%c2_14, %c0_15] : memref<3x128xf32, #tpu.memory_space<vmem>>, vector<1x128xf32>
    %39 = vector.broadcast %38 : vector<1x128xf32> to vector<8x128xf32>
    %40 = arith.addf %37, %39 : vector<8x128xf32>
    %41 = vector.extract_strided_slice %40 {offsets = [0, 0], sizes = [8, 2], strides = [1, 1]} : vector<8x128xf32> to vector<8x2xf32>
    %c0_16 = arith.constant 0 : index
    %c0_17 = arith.constant 0 : index
    %42 = vector.load %arg5[%c0_16, %c0_17] : memref<8x2xf32, #tpu.memory_space<vmem>>, vector<8x2xf32>
    tpu.vector_store %arg5[%c0_16, %c0_17], %41 {strides = array<i32>} : memref<8x2xf32, #tpu.memory_space<vmem>>, vector<8x2xf32>,
    return
  }
  func.func @transform_0(%arg0: i32) -> (i32, i32) {
    %c0_i32 = arith.constant 0 : i32
    %c0_i32_0 = arith.constant 0 : i32
    return %arg0, %c0_i32 : i32, i32
  }
  func.func @transform_1(%arg0: i32) -> (i32, i32) {
    %c0_i32 = arith.constant 0 : i32
    %c0_i32_0 = arith.constant 0 : i32
    %c0_i32_1 = arith.constant 0 : i32
    return %c0_i32, %c0_i32_0 : i32, i32
  }
  func.func @transform_2(%arg0: i32) -> (i32, i32) {
    %c0_i32 = arith.constant 0 : i32
    %c0_i32_0 = arith.constant 0 : i32
    %c0_i32_1 = arith.constant 0 : i32
    return %c0_i32, %c0_i32_0 : i32, i32
  }
  func.func @transform_3(%arg0: i32) -> (i32, i32) {
    %c0_i32 = arith.constant 0 : i32
    %c0_i32_0 = arith.constant 0 : i32
    %c0_i32_1 = arith.constant 0 : i32
    return %c0_i32, %c0_i32_0 : i32, i32
  }
  func.func @transform_4(%arg0: i32) -> (i32, i32) {
    %c0_i32 = arith.constant 0 : i32
    %c0_i32_0 = arith.constant 0 : i32
    return %arg0, %c0_i32 : i32, i32
  }
}

</mosaic_0001>

<llo_original>
// kernel: actionnet_forward.1
$region0: #{actionnet_forward.1}
  #allocation0 [shape = 'u32[]', space=smem, size = 0x4, offset = 0x4, fixed_abs, tag = 'smem constant byte address 0x4 - core index']
  #allocation1 [shape = 'u32[144,128]{1,0:T(1,128)}', space=vmem, size = 0x12000, scoped, tag = 'internal scratch']
  %s0 = inlined_call_operand.vmem [shape: f32[8,4], index: 0, kind: input, shape index: {}]
  %s1 = inlined_call_operand.vmem [shape: f32[4,128], index: 1, kind: input, shape index: {}]
  %s2 = inlined_call_operand.hbm [shape: bf16[256,128], index: 2, kind: input, shape index: {}]
  %s3 = inlined_call_operand.vmem [shape: f32[3,128], index: 3, kind: input, shape index: {}]
  %s4 = inlined_call_operand.vmem [shape: f32[8,2], index: 4, kind: output, shape index: {}]
  %s5 = sld [smem:[#allocation0]]
  $region30: #{actionnet_forward.1} parent=0
    _
  %s7 = ssub.s32 1, %s5
  %s8 = scalar_select 0, %s7, %s5
  $region1: #{actionnet_forward.1} parent=0
    #allocation2 [shape = 'u8[65536]{0}', space=vmem, size = 0x10000, scoped, tag = 'input window, operand 2, single buffered']
    #allocation3 [shape = 's32[1]{0}', space=sflag, size = 0x4, scoped, tag = 'scoped memory for actionnet_forward.1']
    %9 = vsyncpa [#allocation3], 0
    // Predicated region
    $region2: #{actionnet_forward.1} parent=1 // pred_check
      _
    $region3: #{actionnet_forward.1} parent=1 // pred_check_branch
      %11 = sbr.rel (0) target = $region5
    $region4: #{actionnet_forward.1} parent=1 // pred_region
      _
    $region5: #{actionnet_forward.1} parent=1 // pred_fallthru
      _
    // Predicated region
    $region6: #{actionnet_forward.1} parent=1 // pred_check
      _
    $region7: #{actionnet_forward.1} parent=1 // pred_check_branch
      %13 = sbr.rel (0) target = $region9
    $region8: #{actionnet_forward.1} parent=1 // pred_region
      _
    $region9: #{actionnet_forward.1} parent=1 // pred_fallthru
      _
    // Predicated region
    $region10: #{actionnet_forward.1} parent=1 // pred_check
      _
    $region11: #{actionnet_forward.1} parent=1 // pred_check_branch
      %15 = sbr.rel (0) target = $region13
    $region12: #{actionnet_forward.1} parent=1 // pred_region
      %s17 = ssub.s32 2048, 2048
      %18 = vsyncadd [#allocation3], %s17
      %s19 = sshll.u32 [#allocation2], 4
      %s20 = int_to_ptr.vmem [resolvable:$true] %s19
      %25 = dma.hbm_to_vmem [thread:$0]  %s2, 2048, %s20, [#allocation3], 64, 64, 4
    $region13: #{actionnet_forward.1} parent=1 // pred_fallthru
      _
    // Predicated region
    $region14: #{actionnet_forward.1} parent=1 // pred_check
      _
    $region15: #{actionnet_forward.1} parent=1 // pred_check_branch
      %27 = sbr.rel (0) target = $region17
    $region16: #{actionnet_forward.1} parent=1 // pred_region
      _
    $region17: #{actionnet_forward.1} parent=1 // pred_fallthru
      _
    // Predicated region
    $region18: #{actionnet_forward.1} parent=1 // pred_check
      _
    $region19: #{actionnet_forward.1} parent=1 // pred_check_branch
      %29 = sbr.rel (0) target = $region21
    $region20: #{actionnet_forward.1} parent=1 // pred_region
      %30 = dma.done [#allocation3], 2048
    $region21: #{actionnet_forward.1} parent=1 // pred_fallthru
      _
    %v32 = vld [vmem:[%s0] sm:$0xff]
    %v33 = vld [vmem:[%s1] sm:$0x1]
    %35 = vset.pattern.permute.xlu0 0
    %36 = vperm.xlu0 %35, %v32
    %v37 = vpop.permute.xlu0 %36
    %v39 = vlaneseq
    %v40 = vshrl.u32 %v39, 7
    %v41 = vsub.s32 0, %v40
    %v42 = vrot.slane %v33, %v41
    %v43 = vmul.f32 %v37, %v42
    %v44 = vld [vmem:[%s3] sm:$0x1]
    %v45 = vlaneseq
    %v46 = vshrl.u32 %v45, 7
    %v47 = vsub.s32 0, %v46
    %v48 = vrot.slane %v44, %v47
    %v49 = vadd.f32 %v43, %v48
    %v50 = vld [vmem:[%s1 + $0x1] sm:$0x1]
    %51 = vset.pattern.permute.xlu0 1
    %52 = vperm.xlu0 %51, %v32
    %v53 = vpop.permute.xlu0 %52
    %v55 = vlaneseq
    %v56 = vshrl.u32 %v55, 7
    %v57 = vsub.s32 0, %v56
    %v58 = vrot.slane %v50, %v57
    %v59 = vmul.f32 %v53, %v58
    %v60 = vadd.f32 %v49, %v59
    %v61 = vld [vmem:[%s1 + $0x2] sm:$0x1]
    %62 = vset.pattern.permute.xlu0 2
    %63 = vperm.xlu0 %62, %v32
    %v64 = vpop.permute.xlu0 %63
    %v66 = vlaneseq
    %v67 = vshrl.u32 %v66, 7
    %v68 = vsub.s32 0, %v67
    %v69 = vrot.slane %v61, %v68
    %v70 = vmul.f32 %v64, %v69
    %v71 = vadd.f32 %v60, %v70
    %v72 = vld [vmem:[%s1 + $0x3] sm:$0x1]
    %73 = vset.pattern.permute.xlu0 3
    %74 = vperm.xlu0 %73, %v32
    %v75 = vpop.permute.xlu0 %74
    %v77 = vlaneseq
    %v78 = vshrl.u32 %v77, 7
    %v79 = vsub.s32 0, %v78
    %v80 = vrot.slane %v72, %v79
    %v81 = vmul.f32 %v75, %v80
    %v82 = vadd.f32 %v71, %v81
    %v83 = vtanh.pop %v82
    %v84 = vpack.c.bf16 %v83, %v83
    %v85 = vld [vmem:[#allocation2] sm:$0xf]
    %v86 = vld [vmem:[#allocation2 + $0x4] sm:$0xf]
    %v87 = vld [vmem:[#allocation2 + $0x8] sm:$0xf]
    %v88 = vld [vmem:[#allocation2 + $0xc] sm:$0xf]
    %v89 = vld [vmem:[#allocation2 + $0x10] sm:$0xf]
    %v90 = vld [vmem:[#allocation2 + $0x14] sm:$0xf]
    %v91 = vld [vmem:[#allocation2 + $0x18] sm:$0xf]
    %v92 = vld [vmem:[#allocation2 + $0x1c] sm:$0xf]
    %v93 = vld [vmem:[#allocation2 + $0x20] sm:$0xf]
    %v94 = vld [vmem:[#allocation2 + $0x24] sm:$0xf]
    %v95 = vld [vmem:[#allocation2 + $0x28] sm:$0xf]
    %v96 = vld [vmem:[#allocation2 + $0x2c] sm:$0xf]
    %v97 = vld [vmem:[#allocation2 + $0x30] sm:$0xf]
    %v98 = vld [vmem:[#allocation2 + $0x34] sm:$0xf]
    %v99 = vld [vmem:[#allocation2 + $0x38] sm:$0xf]
    %v100 = vld [vmem:[#allocation2 + $0x3c] sm:$0xf]
    %v101 = vld [vmem:[%s3 + $0x1] sm:$0x1]
    %v102 = vlaneseq
    %v103 = vshrl.u32 %v102, 7
    %v104 = vsub.s32 0, %v103
    %v105 = vrot.slane %v101, %v104
    %v122 = vunpack.c.l.b16 %v85
    %v123 = vunpack.c.l.b16 %v86
    %v124 = vunpack.c.l.b16 %v87
    %v125 = vunpack.c.l.b16 %v88
    %v126 = vunpack.c.l.b16 %v89
    %v127 = vunpack.c.l.b16 %v90
    %v128 = vunpack.c.l.b16 %v91
    %v129 = vunpack.c.l.b16 %v92
    %v130 = vunpack.c.l.b16 %v93
    %v131 = vunpack.c.l.b16 %v94
    %v132 = vunpack.c.l.b16 %v95
    %v133 = vunpack.c.l.b16 %v96
    %v134 = vunpack.c.l.b16 %v97
    %v135 = vunpack.c.l.b16 %v98
    %v136 = vunpack.c.l.b16 %v99
    %v137 = vunpack.c.l.b16 %v100
    %v138 = vpack.c.b16 %v123, %v122
    %v139 = vpack.c.b16 %v125, %v124
    %v140 = vpack.c.b16 %v127, %v126
    %v141 = vpack.c.b16 %v129, %v128
    %v142 = vpack.c.b16 %v131, %v130
    %v143 = vpack.c.b16 %v133, %v132
    %v144 = vpack.c.b16 %v135, %v134
    %v145 = vpack.c.b16 %v137, %v136
    %154 = vmatprep.subr.bf16.mxu0 0
    %155 = vmatpush1.bf16.msra.mxu0 %v138
    %156 = vmatprep.subr.bf16.mxu0 0
    %157 = vmatpush1.bf16.msra.mxu0 %v139
    %158 = vmatprep.subr.bf16.mxu0 0
    %159 = vmatpush1.bf16.msra.mxu0 %v140
    %160 = vmatprep.subr.bf16.mxu0 0
    %161 = vmatpush1.bf16.msra.mxu0 %v141
    %162 = vmatprep.subr.bf16.mxu0 0
    %163 = vmatpush1.bf16.msra.mxu0 %v142
    %164 = vmatprep.subr.bf16.mxu0 0
    %165 = vmatpush1.bf16.msra.mxu0 %v143
    %166 = vmatprep.subr.bf16.mxu0 0
    %167 = vmatpush1.bf16.msra.mxu0 %v144
    %168 = vmatprep.subr.bf16.mxu0 0
    %169 = vmatpush1.bf16.msra.mxu0 %v145
    %170 = vmatprep.subr.bf16.mxu0 0
    %171 = vmatpush1.bf16.msra.mxu0 0
    %172 = vmatprep.subr.bf16.mxu0 0
    %173 = vmatpush1.bf16.msra.mxu0 0
    %174 = vmatprep.subr.bf16.mxu0 0
    %175 = vmatpush1.bf16.msra.mxu0 0
    %176 = vmatprep.subr.bf16.mxu0 0
    %177 = vmatpush1.bf16.msra.mxu0 0
    %178 = vmatprep.subr.bf16.mxu0 0
    %179 = vmatpush1.bf16.msra.mxu0 0
    %180 = vmatprep.subr.bf16.mxu0 0
    %181 = vmatpush1.bf16.msra.mxu0 0
    %182 = vmatprep.subr.bf16.mxu0 0
    %183 = vmatpush1.bf16.msra.mxu0 0
    %184 = vmatprep.subr.bf16.mxu0 0
    %185 = vmatpush1.bf16.msra.mxu0 0
    %186 = vmatprep.mubr.bf16.mxu0 0
    %187 = vmatmul.mubr.bf16.gmra.mrb[0].mxu0 %v84
    %v188 = vpop.f32.mrb[0].mxu0
    %v189 = vadd.f32 %v105, %v188
    %v190 = vpop.f32.mrb[0].mxu0
    %v191 = vpop.f32.mrb[0].mxu0
    %v192 = vpop.f32.mrb[0].mxu0
    %193 = vdwg.mxu0
    %v194 = vtanh.pop %v189
    %v195 = vpack.c.bf16 %v194, %v194
    %v196 = vld [vmem:[#allocation2 + $0x40] sm:$0xf]
    %v197 = vld [vmem:[#allocation2 + $0x44] sm:$0xf]
    %v198 = vld [vmem:[#allocation2 + $0x48] sm:$0xf]
    %v199 = vld [vmem:[#allocation2 + $0x4c] sm:$0xf]
    %v200 = vld [vmem:[#allocation2 + $0x50] sm:$0xf]
    %v201 = vld [vmem:[#allocation2 + $0x54] sm:$0xf]
    %v202 = vld [vmem:[#allocation2 + $0x58] sm:$0xf]
    %v203 = vld [vmem:[#allocation2 + $0x5c] sm:$0xf]
    %v204 = vld [vmem:[#allocation2 + $0x60] sm:$0xf]
    %v205 = vld [vmem:[#allocation2 + $0x64] sm:$0xf]
    %v206 = vld [vmem:[#allocation2 + $0x68] sm:$0xf]
    %v207 = vld [vmem:[#allocation2 + $0x6c] sm:$0xf]
    %v208 = vld [vmem:[#allocation2 + $0x70] sm:$0xf]
    %v209 = vld [vmem:[#allocation2 + $0x74] sm:$0xf]
    %v210 = vld [vmem:[#allocation2 + $0x78] sm:$0xf]
    %v211 = vld [vmem:[#allocation2 + $0x7c] sm:$0xf]
    %v212 = vld [vmem:[%s3 + $0x2] sm:$0x1]
    %v213 = vlaneseq
    %v214 = vshrl.u32 %v213, 7
    %v215 = vsub.s32 0, %v214
    %v216 = vrot.slane %v212, %v215
    %v233 = vunpack.c.l.b16 %v196
    %v234 = vunpack.c.l.b16 %v197
    %v235 = vunpack.c.l.b16 %v198
    %v236 = vunpack.c.l.b16 %v199
    %v237 = vunpack.c.l.b16 %v200
    %v238 = vunpack.c.l.b16 %v201
    %v239 = vunpack.c.l.b16 %v202
    %v240 = vunpack.c.l.b16 %v203
    %v241 = vunpack.c.l.b16 %v204
    %v242 = vunpack.c.l.b16 %v205
    %v243 = vunpack.c.l.b16 %v206
    %v244 = vunpack.c.l.b16 %v207
    %v245 = vunpack.c.l.b16 %v208
    %v246 = vunpack.c.l.b16 %v209
    %v247 = vunpack.c.l.b16 %v210
    %v248 = vunpack.c.l.b16 %v211
    %v249 = vpack.c.b16 %v234, %v233
    %v250 = vpack.c.b16 %v236, %v235
    %v251 = vpack.c.b16 %v238, %v237
    %v252 = vpack.c.b16 %v240, %v239
    %v253 = vpack.c.b16 %v242, %v241
    %v254 = vpack.c.b16 %v244, %v243
    %v255 = vpack.c.b16 %v246, %v245
    %v256 = vpack.c.b16 %v248, %v247
    %265 = vmatprep.subr.bf16.mxu0 0
    %266 = vmatpush1.bf16.msra.mxu0 %v249
    %267 = vmatprep.subr.bf16.mxu0 0
    %268 = vmatpush1.bf16.msra.mxu0 %v250
    %269 = vmatprep.subr.bf16.mxu0 0
    %270 = vmatpush1.bf16.msra.mxu0 %v251
    %271 = vmatprep.subr.bf16.mxu0 0
    %272 = vmatpush1.bf16.msra.mxu0 %v252
    %273 = vmatprep.subr.bf16.mxu0 0
    %274 = vmatpush1.bf16.msra.mxu0 %v253
    %275 = vmatprep.subr.bf16.mxu0 0
    %276 = vmatpush1.bf16.msra.mxu0 %v254
    %277 = vmatprep.subr.bf16.mxu0 0
    %278 = vmatpush1.bf16.msra.mxu0 %v255
    %279 = vmatprep.subr.bf16.mxu0 0
    %280 = vmatpush1.bf16.msra.mxu0 %v256
    %281 = vmatprep.subr.bf16.mxu0 0
    %282 = vmatpush1.bf16.msra.mxu0 0
    %283 = vmatprep.subr.bf16.mxu0 0
    %284 = vmatpush1.bf16.msra.mxu0 0
    %285 = vmatprep.subr.bf16.mxu0 0
    %286 = vmatpush1.bf16.msra.mxu0 0
    %287 = vmatprep.subr.bf16.mxu0 0
    %288 = vmatpush1.bf16.msra.mxu0 0
    %289 = vmatprep.subr.bf16.mxu0 0
    %290 = vmatpush1.bf16.msra.mxu0 0
    %291 = vmatprep.subr.bf16.mxu0 0
    %292 = vmatpush1.bf16.msra.mxu0 0
    %293 = vmatprep.subr.bf16.mxu0 0
    %294 = vmatpush1.bf16.msra.mxu0 0
    %295 = vmatprep.subr.bf16.mxu0 0
    %296 = vmatpush1.bf16.msra.mxu0 0
    %297 = vmatprep.mubr.bf16.mxu0 0
    %298 = vmatmul.mubr.bf16.gmra.mrb[0].mxu0 %v195
    %v299 = vpop.f32.mrb[0].mxu0
    %v300 = vadd.f32 %v216, %v299
    %v301 = vpop.f32.mrb[0].mxu0
    %v302 = vpop.f32.mrb[0].mxu0
    %v303 = vpop.f32.mrb[0].mxu0
    %304 = vdwg.mxu0
    %vm305 = vcmask 15360
    %306 = vst.msk [vmem:[%s4] sm:$0xff] %vm305, %v300
    // Predicated region
    $region22: #{actionnet_forward.1} parent=1 // pred_check
      _
    $region23: #{actionnet_forward.1} parent=1 // pred_check_branch
      %308 = sbr.rel (0) target = $region25
    $region24: #{actionnet_forward.1} parent=1 // pred_region
      _
    $region25: #{actionnet_forward.1} parent=1 // pred_fallthru
      _
    // Predicated region
    $region26: #{actionnet_forward.1} parent=1 // pred_check
      _
    $region27: #{actionnet_forward.1} parent=1 // pred_check_branch
      %310 = sbr.rel (0) target = $region29
    $region28: #{actionnet_forward.1} parent=1 // pred_region
      _
    $region29: #{actionnet_forward.1} parent=1 // pred_fallthru
      _
    %311 = vsyncpa [#allocation3], 1

</llo_original>
